<compile_context>
chip_gen: v5e
topology: v5e:2x2
jax: 0.10.0
libtpu: 0.0.40
codegen_flags: <defaults>
</compile_context>

<pallas_src>
import jax
import jax.numpy as jnp
from jax.experimental import pallas as pl
from jax.experimental.pallas import tpu as pltpu


_NEG_SLOPE = 0.01  # PyTorch nn.LeakyReLU() default negative_slope


def _leaky_relu(x):
    # max(x, a*x) == leaky_relu(x) for 0 < a < 1
    return jnp.maximum(x, _NEG_SLOPE * x)


def _round_up(x, m):
    return ((x + m - 1) // m) * m


def invdyn_kernel(
    x_ref,                                # (TB, 2*sd)   bf16  (concat fused in wrapper)
    w1_ref, b1_ref,                       # (2*sd, 256) bf16, (1, 256) f32
    w2_ref, b2_ref,                       # (256, 256)  bf16, (1, 256) f32
    w3_ref, b3_ref,                       # (256, 256)  bf16, (1, 256) f32
    w4_ref, b4_ref,                       # (256, h4p)  bf16, (1, h4p) f32
    w5_ref, b5_ref,                       # (h4p, outp) bf16, (1, outp) f32
    out_ref,                              # (TB, outp)  f32
):
    f32 = jnp.float32
    bf16 = jnp.bfloat16

    # layer 1: cat([state, next_state], dim=1) @ W1 + b1
    h = _leaky_relu(
        jnp.dot(x_ref[...], w1_ref[...], preferred_element_type=f32)
        + b1_ref[...])

    # layers 2-4 (nn.Dropout(0.15) is eval-mode identity)
    h = _leaky_relu(
        jnp.dot(h.astype(bf16), w2_ref[...], preferred_element_type=f32)
        + b2_ref[...])
    h = _leaky_relu(
        jnp.dot(h.astype(bf16), w3_ref[...], preferred_element_type=f32)
        + b3_ref[...])
    h = _leaky_relu(
        jnp.dot(h.astype(bf16), w4_ref[...], preferred_element_type=f32)
        + b4_ref[...])

    # layer 5 + tanh; padded w4 columns give exact zeros and padded w5 rows are
    # zero, so the lane padding never perturbs the real output columns.
    out_ref[...] = jnp.tanh(
        jnp.dot(h.astype(bf16), w5_ref[...], preferred_element_type=f32)
        + b5_ref[...])


def invdyn_forward(state, next_state, params, *, max_block_b=1024, min_grid=2):
    """Equivalent to InvDyn.forward(state, next_state) in eval mode."""
    B, sd = state.shape
    in_dim = 2 * sd
    hidden = params["w2"].shape[0]
    h4 = params["w4"].shape[1]            # 4 * action_dim
    act_dim = params["w5"].shape[1]

    bf16, f32 = jnp.bfloat16, jnp.float32

    # ---- parameter packing (cheap, fused by XLA) -------------------------
    h4_pad = max(_round_up(h4, 128), 128)      # lane-dense hidden-4 width
    out_pad = max(_round_up(act_dim, 128), 128)  # lane-dense output width

    w1 = params["w1"].astype(bf16)
    w2 = params["w2"].astype(bf16)
    w3 = params["w3"].astype(bf16)
    w4 = jnp.zeros((hidden, h4_pad), bf16).at[:, :h4].set(
        params["w4"].astype(bf16))
    b4 = jnp.zeros((1, h4_pad), f32).at[:, :h4].set(params["b4"])
    w5 = jnp.zeros((h4_pad, out_pad), bf16).at[:h4, :act_dim].set(
        params["w5"].astype(bf16))
    b5 = jnp.zeros((1, out_pad), f32).at[:, :act_dim].set(params["b5"])
    b1, b2, b3 = params["b1"], params["b2"], params["b3"]

    # Fused concat + bf16 cast in the wrapper: one input stream, half the bytes.
    x = jnp.concatenate([state, next_state], axis=1).astype(bf16)

    # ---- batch tiling -----------------------------------------------------
    # >= min_grid steps when B allows it (feeds both v7x TensorCores) while
    # keeping the padded remainder small (no B=600 -> 1024 blow-up).
    n_tiles = max(pl.cdiv(B, max_block_b), min_grid)
    block_b = max(_round_up(pl.cdiv(B, n_tiles), 8), 8)
    grid_b = pl.cdiv(B, block_b)
    B_pad = grid_b * block_b
    if B_pad != B:
        x = jnp.pad(x, ((0, B_pad - B), (0, 0)))

    def row_spec(d):
        return pl.BlockSpec((block_b, d), lambda i: (i, 0))

    def resident_spec(a):
        # Constant index_map -> VMEM-resident across grid steps; single buffer.
        return pl.BlockSpec(a.shape, lambda i: (0, 0),
                            pipeline_mode=pl.Buffered(1))

    flops = 2 * B_pad * (in_dim * hidden + 2 * hidden * hidden
                         + hidden * h4_pad + h4_pad * out_pad)
    param_bytes = sum(int(a.size) * a.dtype.itemsize
                      for a in (w1, b1, w2, b2, w3, b3, w4, b4, w5, b5))
    bytes_accessed = int(x.size) * 2 + B_pad * out_pad * 4 + param_bytes

    out = pl.pallas_call(
        invdyn_kernel,
        out_shape=jax.ShapeDtypeStruct((B_pad, out_pad), f32),
        grid_spec=pltpu.PrefetchScalarGridSpec(
            num_scalar_prefetch=0,
            grid=(grid_b,),
            in_specs=[
                row_spec(in_dim),
                resident_spec(w1), resident_spec(b1),
                resident_spec(w2), resident_spec(b2),
                resident_spec(w3), resident_spec(b3),
                resident_spec(w4), resident_spec(b4),
                resident_spec(w5), resident_spec(b5),
            ],
            out_specs=row_spec(out_pad),
        ),
        compiler_params=pltpu.CompilerParams(
            dimension_semantics=("parallel",)),
        cost_estimate=pl.CostEstimate(
            flops=flops,
            transcendentals=B_pad * out_pad,
            bytes_accessed=bytes_accessed),
    )(x, w1, b1, w2, b2, w3, b3, w4, b4, w5, b5)

    return out[:B, :act_dim]


def init_params(key, state_dim, action_dim, hidden=256):
    """Deterministic synthetic parameters; weights stored as (in, out)."""
    dims = [2 * state_dim, hidden, hidden, hidden, 4 * action_dim, action_dim]
    keys = jax.random.split(key, 2 * (len(dims) - 1))
    params = {}
    for j in range(len(dims) - 1):
        fan_in = dims[j]
        scale = 1.0 / jnp.sqrt(fan_in)
        params[f"w{j + 1}"] = jax.random.uniform(
            keys[2 * j], (dims[j], dims[j + 1]), jnp.float32, -scale, scale)
        params[f"b{j + 1}"] = jax.random.uniform(
            keys[2 * j + 1], (1, dims[j + 1]), jnp.float32, -scale, scale)
    return params


def _reference_forward(state, next_state, params):
    # Pure-JAX reference mirroring the PyTorch module (eval mode), using the
    # same bf16-input / f32-accumulate contraction the kernel uses.
    def mdot(a, w):
        return jnp.dot(a.astype(jnp.bfloat16), w.astype(jnp.bfloat16),
                       preferred_element_type=jnp.float32)

    x = jnp.concatenate([state, next_state], axis=1)
    h = _leaky_relu(mdot(x, params["w1"]) + params["b1"])
    h = _leaky_relu(mdot(h, params["w2"]) + params["b2"])
    h = _leaky_relu(mdot(h, params["w3"]) + params["b3"])
    h = _leaky_relu(mdot(h, params["w4"]) + params["b4"])
    return jnp.tanh(mdot(h, params["w5"]) + params["b5"])


if __name__ == "__main__":
    state_dim, action_dim, batch = 16, 8, 8

    key = jax.random.PRNGKey(0)
    k_param, k_state, k_next = jax.random.split(key, 3)

    params = init_params(k_param, state_dim, action_dim)
    state = jax.random.normal(k_state, (batch, state_dim), jnp.float32)
    next_state = jax.random.normal(k_next, (batch, state_dim), jnp.float32)

    out = invdyn_forward(state, next_state, params)
    jax.block_until_ready(out)

    ref = _reference_forward(state, next_state, params)
    assert out.shape == (batch, action_dim)
    assert bool(jnp.allclose(out, ref, atol=2e-4, rtol=2e-4)), \
        float(jnp.max(jnp.abs(out - ref)))

    print("KERNEL_OK")
</pallas_src>

<mosaic_0001>
module attributes {stable_mosaic.version = 11 : i64} {
  func.func @invdyn_kernel(%arg0: i32, %arg1: memref<8x32xbf16, #tpu.memory_space<vmem>>, %arg2: memref<32x256xbf16, #tpu.memory_space<vmem>>, %arg3: memref<1x256xf32, #tpu.memory_space<vmem>>, %arg4: memref<256x256xbf16, #tpu.memory_space<vmem>>, %arg5: memref<1x256xf32, #tpu.memory_space<vmem>>, %arg6: memref<256x256xbf16, #tpu.memory_space<vmem>>, %arg7: memref<1x256xf32, #tpu.memory_space<vmem>>, %arg8: memref<256x128xbf16, #tpu.memory_space<vmem>>, %arg9: memref<1x128xf32, #tpu.memory_space<vmem>>, %arg10: memref<128x128xbf16, #tpu.memory_space<vmem>>, %arg11: memref<1x128xf32, #tpu.memory_space<vmem>>, %arg12: memref<8x128xf32, #tpu.memory_space<vmem>>) attributes {dimension_semantics = [#tpu.dimension_semantics<parallel>], iteration_bounds = array<i64: 1>, scalar_prefetch = 0 : i64, scratch_operands = 0 : i64, tpu.core_type = #tpu.core_type<tc>, window_params = [{transform_indices = @transform_0, window_bounds = array<i64: 8, 32>}, {pipeline_mode = #tpu.pipeline_mode<synchronous>, transform_indices = @transform_1, window_bounds = array<i64: 32, 256>}, {pipeline_mode = #tpu.pipeline_mode<synchronous>, transform_indices = @transform_2, window_bounds = array<i64: 1, 256>}, {pipeline_mode = #tpu.pipeline_mode<synchronous>, transform_indices = @transform_3, window_bounds = array<i64: 256, 256>}, {pipeline_mode = #tpu.pipeline_mode<synchronous>, transform_indices = @transform_4, window_bounds = array<i64: 1, 256>}, {pipeline_mode = #tpu.pipeline_mode<synchronous>, transform_indices = @transform_5, window_bounds = array<i64: 256, 256>}, {pipeline_mode = #tpu.pipeline_mode<synchronous>, transform_indices = @transform_6, window_bounds = array<i64: 1, 256>}, {pipeline_mode = #tpu.pipeline_mode<synchronous>, transform_indices = @transform_7, window_bounds = array<i64: 256, 128>}, {pipeline_mode = #tpu.pipeline_mode<synchronous>, transform_indices = @transform_8, window_bounds = array<i64: 1, 128>}, {pipeline_mode = #tpu.pipeline_mode<synchronous>, transform_indices = @transform_9, window_bounds = array<i64: 128, 128>}, {pipeline_mode = #tpu.pipeline_mode<synchronous>, transform_indices = @transform_10, window_bounds = array<i64: 1, 128>}, {transform_indices = @transform_11, window_bounds = array<i64: 8, 128>}]} {
    %c0 = arith.constant 0 : index
    %c0_0 = arith.constant 0 : index
    %0 = vector.load %arg1[%c0, %c0_0] : memref<8x32xbf16, #tpu.memory_space<vmem>>, vector<8x32xbf16>
    %c0_1 = arith.constant 0 : index
    %c0_2 = arith.constant 0 : index
    %1 = vector.load %arg2[%c0_1, %c0_2] : memref<32x256xbf16, #tpu.memory_space<vmem>>, vector<32x256xbf16>
    %cst = arith.constant dense<0.000000e+00> : vector<8x256xf32>
    %2 = tpu.matmul %0, %1, %cst {dimension_numbers = #tpu.dot_dimension_numbers<[1], [0], [0], [1], [0, 0, 1, 1], [], []>} : vector<8x32xbf16>, vector<32x256xbf16>, vector<8x256xf32> -> vector<8x256xf32>
    %c0_3 = arith.constant 0 : index
    %c0_4 = arith.constant 0 : index
    %3 = vector.load %arg3[%c0_3, %c0_4] : memref<1x256xf32, #tpu.memory_space<vmem>>, vector<1x256xf32>
    %4 = vector.broadcast %3 : vector<1x256xf32> to vector<8x256xf32>
    %5 = arith.addf %2, %4 : vector<8x256xf32>
    %cst_5 = arith.constant 0.00999999977 : f32
    %6 = vector.broadcast %cst_5 : f32 to vector<8x256xf32>
    %7 = arith.mulf %6, %5 : vector<8x256xf32>
    %8 = arith.maximumf %5, %7 : vector<8x256xf32>
    %9 = arith.truncf %8 : vector<8x256xf32> to vector<8x256xbf16>
    %c0_6 = arith.constant 0 : index
    %c0_7 = arith.constant 0 : index
    %10 = vector.load %arg4[%c0_6, %c0_7] : memref<256x256xbf16, #tpu.memory_space<vmem>>, vector<256x256xbf16>
    %cst_8 = arith.constant dense<0.000000e+00> : vector<8x256xf32>
    %11 = tpu.matmul %9, %10, %cst_8 {dimension_numbers = #tpu.dot_dimension_numbers<[1], [0], [0], [1], [0, 0, 1, 1], [], []>} : vector<8x256xbf16>, vector<256x256xbf16>, vector<8x256xf32> -> vector<8x256xf32>
    %c0_9 = arith.constant 0 : index
    %c0_10 = arith.constant 0 : index
    %12 = vector.load %arg5[%c0_9, %c0_10] : memref<1x256xf32, #tpu.memory_space<vmem>>, vector<1x256xf32>
    %13 = vector.broadcast %12 : vector<1x256xf32> to vector<8x256xf32>
    %14 = arith.addf %11, %13 : vector<8x256xf32>
    %cst_11 = arith.constant 0.00999999977 : f32
    %15 = vector.broadcast %cst_11 : f32 to vector<8x256xf32>
    %16 = arith.mulf %15, %14 : vector<8x256xf32>
    %17 = arith.maximumf %14, %16 : vector<8x256xf32>
    %18 = arith.truncf %17 : vector<8x256xf32> to vector<8x256xbf16>
    %c0_12 = arith.constant 0 : index
    %c0_13 = arith.constant 0 : index
    %19 = vector.load %arg6[%c0_12, %c0_13] : memref<256x256xbf16, #tpu.memory_space<vmem>>, vector<256x256xbf16>
    %cst_14 = arith.constant dense<0.000000e+00> : vector<8x256xf32>
    %20 = tpu.matmul %18, %19, %cst_14 {dimension_numbers = #tpu.dot_dimension_numbers<[1], [0], [0], [1], [0, 0, 1, 1], [], []>} : vector<8x256xbf16>, vector<256x256xbf16>, vector<8x256xf32> -> vector<8x256xf32>
    %c0_15 = arith.constant 0 : index
    %c0_16 = arith.constant 0 : index
    %21 = vector.load %arg7[%c0_15, %c0_16] : memref<1x256xf32, #tpu.memory_space<vmem>>, vector<1x256xf32>
    %22 = vector.broadcast %21 : vector<1x256xf32> to vector<8x256xf32>
    %23 = arith.addf %20, %22 : vector<8x256xf32>
    %cst_17 = arith.constant 0.00999999977 : f32
    %24 = vector.broadcast %cst_17 : f32 to vector<8x256xf32>
    %25 = arith.mulf %24, %23 : vector<8x256xf32>
    %26 = arith.maximumf %23, %25 : vector<8x256xf32>
    %27 = arith.truncf %26 : vector<8x256xf32> to vector<8x256xbf16>
    %c0_18 = arith.constant 0 : index
    %c0_19 = arith.constant 0 : index
    %28 = vector.load %arg8[%c0_18, %c0_19] : memref<256x128xbf16, #tpu.memory_space<vmem>>, vector<256x128xbf16>
    %cst_20 = arith.constant dense<0.000000e+00> : vector<8x128xf32>
    %29 = tpu.matmul %27, %28, %cst_20 {dimension_numbers = #tpu.dot_dimension_numbers<[1], [0], [0], [1], [0, 0, 1, 1], [], []>} : vector<8x256xbf16>, vector<256x128xbf16>, vector<8x128xf32> -> vector<8x128xf32>
    %c0_21 = arith.constant 0 : index
    %c0_22 = arith.constant 0 : index
    %30 = vector.load %arg9[%c0_21, %c0_22] : memref<1x128xf32, #tpu.memory_space<vmem>>, vector<1x128xf32>
    %31 = vector.broadcast %30 : vector<1x128xf32> to vector<8x128xf32>
    %32 = arith.addf %29, %31 : vector<8x128xf32>
    %cst_23 = arith.constant 0.00999999977 : f32
    %33 = vector.broadcast %cst_23 : f32 to vector<8x128xf32>
    %34 = arith.mulf %33, %32 : vector<8x128xf32>
    %35 = arith.maximumf %32, %34 : vector<8x128xf32>
    %36 = arith.truncf %35 : vector<8x128xf32> to vector<8x128xbf16>
    %c0_24 = arith.constant 0 : index
    %c0_25 = arith.constant 0 : index
    %37 = vector.load %arg10[%c0_24, %c0_25] : memref<128x128xbf16, #tpu.memory_space<vmem>>, vector<128x128xbf16>
    %cst_26 = arith.constant dense<0.000000e+00> : vector<8x128xf32>
    %38 = tpu.matmul %36, %37, %cst_26 {dimension_numbers = #tpu.dot_dimension_numbers<[1], [0], [0], [1], [0, 0, 1, 1], [], []>} : vector<8x128xbf16>, vector<128x128xbf16>, vector<8x128xf32> -> vector<8x128xf32>
    %c0_27 = arith.constant 0 : index
    %c0_28 = arith.constant 0 : index
    %39 = vector.load %arg11[%c0_27, %c0_28] : memref<1x128xf32, #tpu.memory_space<vmem>>, vector<1x128xf32>
    %40 = vector.broadcast %39 : vector<1x128xf32> to vector<8x128xf32>
    %41 = arith.addf %38, %40 : vector<8x128xf32>
    %42 = math.tanh %41 : vector<8x128xf32>
    %c0_29 = arith.constant 0 : index
    %c0_30 = arith.constant 0 : index
    %43 = vector.load %arg12[%c0_29, %c0_30] : memref<8x128xf32, #tpu.memory_space<vmem>>, vector<8x128xf32>
    tpu.vector_store %arg12[%c0_29, %c0_30], %42 {strides = array<i32>} : memref<8x128xf32, #tpu.memory_space<vmem>>, vector<8x128xf32>,
    return
  }
  func.func @transform_0(%arg0: i32) -> (i32, i32) {
    %c0_i32 = arith.constant 0 : i32
    %c0_i32_0 = arith.constant 0 : i32
    return %arg0, %c0_i32 : i32, i32
  }
  func.func @transform_1(%arg0: i32) -> (i32, i32) {
    %c0_i32 = arith.constant 0 : i32
    %c0_i32_0 = arith.constant 0 : i32
    %c0_i32_1 = arith.constant 0 : i32
    return %c0_i32, %c0_i32_0 : i32, i32
  }
  func.func @transform_2(%arg0: i32) -> (i32, i32) {
    %c0_i32 = arith.constant 0 : i32
    %c0_i32_0 = arith.constant 0 : i32
    %c0_i32_1 = arith.constant 0 : i32
    return %c0_i32, %c0_i32_0 : i32, i32
  }
  func.func @transform_3(%arg0: i32) -> (i32, i32) {
    %c0_i32 = arith.constant 0 : i32
    %c0_i32_0 = arith.constant 0 : i32
    %c0_i32_1 = arith.constant 0 : i32
    return %c0_i32, %c0_i32_0 : i32, i32
  }
  func.func @transform_4(%arg0: i32) -> (i32, i32) {
    %c0_i32 = arith.constant 0 : i32
    %c0_i32_0 = arith.constant 0 : i32
    %c0_i32_1 = arith.constant 0 : i32
    return %c0_i32, %c0_i32_0 : i32, i32
  }
  func.func @transform_5(%arg0: i32) -> (i32, i32) {
    %c0_i32 = arith.constant 0 : i32
    %c0_i32_0 = arith.constant 0 : i32
    %c0_i32_1 = arith.constant 0 : i32
    return %c0_i32, %c0_i32_0 : i32, i32
  }
  func.func @transform_6(%arg0: i32) -> (i32, i32) {
    %c0_i32 = arith.constant 0 : i32
    %c0_i32_0 = arith.constant 0 : i32
    %c0_i32_1 = arith.constant 0 : i32
    return %c0_i32, %c0_i32_0 : i32, i32
  }
  func.func @transform_7(%arg0: i32) -> (i32, i32) {
    %c0_i32 = arith.constant 0 : i32
    %c0_i32_0 = arith.constant 0 : i32
    %c0_i32_1 = arith.constant 0 : i32
    return %c0_i32, %c0_i32_0 : i32, i32
  }
  func.func @transform_8(%arg0: i32) -> (i32, i32) {
    %c0_i32 = arith.constant 0 : i32
    %c0_i32_0 = arith.constant 0 : i32
    %c0_i32_1 = arith.constant 0 : i32
    return %c0_i32, %c0_i32_0 : i32, i32
  }
  func.func @transform_9(%arg0: i32) -> (i32, i32) {
    %c0_i32 = arith.constant 0 : i32
    %c0_i32_0 = arith.constant 0 : i32
    %c0_i32_1 = arith.constant 0 : i32
    return %c0_i32, %c0_i32_0 : i32, i32
  }
  func.func @transform_10(%arg0: i32) -> (i32, i32) {
    %c0_i32 = arith.constant 0 : i32
    %c0_i32_0 = arith.constant 0 : i32
    %c0_i32_1 = arith.constant 0 : i32
    return %c0_i32, %c0_i32_0 : i32, i32
  }
  func.func @transform_11(%arg0: i32) -> (i32, i32) {
    %c0_i32 = arith.constant 0 : i32
    %c0_i32_0 = arith.constant 0 : i32
    return %arg0, %c0_i32 : i32, i32
  }
}

</mosaic_0001>

<llo_original>
// kernel: tpu_custom_call.1
$region0: #{tpu_custom_call.1}
  #allocation0 [shape = 'u32[]', space=smem, size = 0x4, offset = 0x4, fixed_abs, tag = 'smem constant byte address 0x4 - core index']
  #allocation1 [shape = 'u32[72,128]{1,0:T(1,128)}', space=vmem, size = 0x9000, scoped, tag = 'internal scratch']
  %s0 = inlined_call_operand.hbm [shape: bf16[8,32], index: 0, kind: input, shape index: {}]
  %s1 = inlined_call_operand.hbm [shape: bf16[32,256], index: 1, kind: input, shape index: {}]
  %s2 = inlined_call_operand.hbm [shape: f32[1,256], index: 2, kind: input, shape index: {}]
  %s3 = inlined_call_operand.hbm [shape: bf16[256,256], index: 3, kind: input, shape index: {}]
  %s4 = inlined_call_operand.vmem [shape: f32[1,256], index: 4, kind: input, shape index: {}]
  %s5 = inlined_call_operand.hbm [shape: bf16[256,256], index: 5, kind: input, shape index: {}]
  %s6 = inlined_call_operand.vmem [shape: f32[1,256], index: 6, kind: input, shape index: {}]
  %s7 = inlined_call_operand.hbm [shape: bf16[256,128], index: 7, kind: input, shape index: {}]
  %s8 = inlined_call_operand.vmem [shape: f32[1,128], index: 8, kind: input, shape index: {}]
  %s9 = inlined_call_operand.hbm [shape: bf16[128,128], index: 9, kind: input, shape index: {}]
  %s10 = inlined_call_operand.vmem [shape: f32[1,128], index: 10, kind: input, shape index: {}]
  %s11 = inlined_call_operand.hbm [shape: f32[8,128], index: 11, kind: output, shape index: {}]
  %s12 = sld [smem:[#allocation0]]
  $region82: #{tpu_custom_call.1} parent=0
    _
  %s14 = ssub.s32 1, %s12
  %s15 = scalar_select 0, %s14, %s12
  $region1: #{tpu_custom_call.1} parent=0
    #allocation2 [shape = 'u8[2048]{0}', space=vmem, size = 0x800, scoped, tag = 'input window, operand 0, single buffered']
    #allocation3 [shape = 's32[1]{0}', space=sflag, size = 0x4, scoped, tag = 'scoped memory for tpu_custom_call.1']
    #allocation4 [shape = 's32[1]{0}', space=sflag, size = 0x4, scoped, tag = 'scoped memory for tpu_custom_call.1']
    #allocation5 [shape = 'u8[16384]{0}', space=vmem, size = 0x4000, scoped, tag = 'input window, operand 1, single buffered']
    #allocation6 [shape = 's32[1]{0}', space=sflag, size = 0x4, scoped, tag = 'scoped memory for tpu_custom_call.1']
    #allocation7 [shape = 'u8[1024]{0}', space=vmem, size = 0x400, scoped, tag = 'input window, operand 2, single buffered']
    #allocation8 [shape = 'u8[131072]{0}', space=vmem, size = 0x20000, scoped, tag = 'input window, operand 3, single buffered']
    #allocation9 [shape = 's32[1]{0}', space=sflag, size = 0x4, scoped, tag = 'scoped memory for tpu_custom_call.1']
    #allocation10 [shape = 'u8[131072]{0}', space=vmem, size = 0x20000, scoped, tag = 'input window, operand 5, single buffered']
    #allocation11 [shape = 'u8[65536]{0}', space=vmem, size = 0x10000, scoped, tag = 'input window, operand 7, single buffered']
    #allocation12 [shape = 's32[1]{0}', space=sflag, size = 0x4, scoped, tag = 'scoped memory for tpu_custom_call.1']
    #allocation13 [shape = 'u8[32768]{0}', space=vmem, size = 0x8000, scoped, tag = 'input window, operand 9, single buffered']
    #allocation14 [shape = 'u8[4096]{0}', space=vmem, size = 0x1000, scoped, tag = 'output window, operand 0, single buffered']
    %16 = vsyncpa [#allocation3], 0
    %17 = vsyncpa [#allocation6], 0
    %18 = vsyncpa [#allocation9], 0
    %19 = vsyncpa [#allocation12], 0
    %20 = vsyncpa [#allocation4], 0
    // Predicated region
    $region2: #{tpu_custom_call.1} parent=1 // pred_check
      _
    $region3: #{tpu_custom_call.1} parent=1 // pred_check_branch
      %22 = sbr.rel (0) target = $region5
    $region4: #{tpu_custom_call.1} parent=1 // pred_region
      %24 = vsyncadd [#allocation3], 0
      %s26 = sshll.u32 %s0, 4
      %s27 = int_to_ptr.hbm [resolvable:$true] %s26
      %s28 = sshll.u32 [#allocation2], 4
      %s29 = int_to_ptr.vmem [resolvable:$true] %s28
      %31 = dma.hbm_to_vmem [thread:$0]  %s27, 64, %s29, [#allocation3]
    $region5: #{tpu_custom_call.1} parent=1 // pred_fallthru
      _
    // Predicated region
    $region6: #{tpu_custom_call.1} parent=1 // pred_check
      _
    $region7: #{tpu_custom_call.1} parent=1 // pred_check_branch
      %33 = sbr.rel (0) target = $region9
    $region8: #{tpu_custom_call.1} parent=1 // pred_region
      %35 = vsyncadd [#allocation6], 0
      %s36 = sshll.u32 %s1, 4
      %s37 = int_to_ptr.hbm [resolvable:$true] %s36
      %s38 = sshll.u32 [#allocation5], 4
      %s39 = int_to_ptr.vmem [resolvable:$true] %s38
      %44 = dma.hbm_to_vmem [thread:$0]  %s37, 512, %s39, [#allocation6], 128, 128, 8
    $region9: #{tpu_custom_call.1} parent=1 // pred_fallthru
      _
    // Predicated region
    $region10: #{tpu_custom_call.1} parent=1 // pred_check
      _
    $region11: #{tpu_custom_call.1} parent=1 // pred_check_branch
      %46 = sbr.rel (0) target = $region13
    $region12: #{tpu_custom_call.1} parent=1 // pred_region
      %48 = vsyncadd [#allocation6], 0
      %s50 = sshll.u32 %s2, 4
      %s51 = int_to_ptr.hbm [resolvable:$true] %s50
      %s52 = sshll.u32 [#allocation7], 4
      %s53 = int_to_ptr.vmem [resolvable:$true] %s52
      %55 = dma.hbm_to_vmem [thread:$0]  %s51, 32, %s53, [#allocation6]
    $region13: #{tpu_custom_call.1} parent=1 // pred_fallthru
      _
    // Predicated region
    $region14: #{tpu_custom_call.1} parent=1 // pred_check
      _
    $region15: #{tpu_custom_call.1} parent=1 // pred_check_branch
      %57 = sbr.rel (0) target = $region17
    $region16: #{tpu_custom_call.1} parent=1 // pred_region
      %59 = vsyncadd [#allocation9], 0
      %s60 = sshll.u32 %s3, 4
      %s61 = int_to_ptr.hbm [resolvable:$true] %s60
      %s62 = sshll.u32 [#allocation8], 4
      %s63 = int_to_ptr.vmem [resolvable:$true] %s62
      %68 = dma.hbm_to_vmem [thread:$0]  %s61, 4096, %s63, [#allocation9], 128, 128, 8
    $region17: #{tpu_custom_call.1} parent=1 // pred_fallthru
      _
    // Predicated region
    $region18: #{tpu_custom_call.1} parent=1 // pred_check
      _
    $region19: #{tpu_custom_call.1} parent=1 // pred_check_branch
      %70 = sbr.rel (0) target = $region21
    $region20: #{tpu_custom_call.1} parent=1 // pred_region
      _
    $region21: #{tpu_custom_call.1} parent=1 // pred_fallthru
      _
    // Predicated region
    $region22: #{tpu_custom_call.1} parent=1 // pred_check
      _
    $region23: #{tpu_custom_call.1} parent=1 // pred_check_branch
      %72 = sbr.rel (0) target = $region25
    $region24: #{tpu_custom_call.1} parent=1 // pred_region
      %74 = vsyncadd [#allocation9], 0
      %s75 = sshll.u32 %s5, 4
      %s76 = int_to_ptr.hbm [resolvable:$true] %s75
      %s77 = sshll.u32 [#allocation10], 4
      %s78 = int_to_ptr.vmem [resolvable:$true] %s77
      %83 = dma.hbm_to_vmem [thread:$0]  %s76, 4096, %s78, [#allocation9], 128, 128, 8
    $region25: #{tpu_custom_call.1} parent=1 // pred_fallthru
      _
    // Predicated region
    $region26: #{tpu_custom_call.1} parent=1 // pred_check
      _
    $region27: #{tpu_custom_call.1} parent=1 // pred_check_branch
      %85 = sbr.rel (0) target = $region29
    $region28: #{tpu_custom_call.1} parent=1 // pred_region
      _
    $region29: #{tpu_custom_call.1} parent=1 // pred_fallthru
      _
    // Predicated region
    $region30: #{tpu_custom_call.1} parent=1 // pred_check
      _
    $region31: #{tpu_custom_call.1} parent=1 // pred_check_branch
      %87 = sbr.rel (0) target = $region33
    $region32: #{tpu_custom_call.1} parent=1 // pred_region
      %89 = vsyncadd [#allocation12], 0
      %s90 = sshll.u32 %s7, 4
      %s91 = int_to_ptr.hbm [resolvable:$true] %s90
      %s92 = sshll.u32 [#allocation11], 4
      %s93 = int_to_ptr.vmem [resolvable:$true] %s92
      %98 = dma.hbm_to_vmem [thread:$0]  %s91, 2048, %s93, [#allocation12], 64, 64, 4
    $region33: #{tpu_custom_call.1} parent=1 // pred_fallthru
      _
    // Predicated region
    $region34: #{tpu_custom_call.1} parent=1 // pred_check
      _
    $region35: #{tpu_custom_call.1} parent=1 // pred_check_branch
      %100 = sbr.rel (0) target = $region37
    $region36: #{tpu_custom_call.1} parent=1 // pred_region
      _
    $region37: #{tpu_custom_call.1} parent=1 // pred_fallthru
      _
    // Predicated region
    $region38: #{tpu_custom_call.1} parent=1 // pred_check
      _
    $region39: #{tpu_custom_call.1} parent=1 // pred_check_branch
      %102 = sbr.rel (0) target = $region41
    $region40: #{tpu_custom_call.1} parent=1 // pred_region
      %104 = vsyncadd [#allocation12], 0
      %s105 = sshll.u32 %s9, 4
      %s106 = int_to_ptr.hbm [resolvable:$true] %s105
      %s107 = sshll.u32 [#allocation13], 4
      %s108 = int_to_ptr.vmem [resolvable:$true] %s107
      %113 = dma.hbm_to_vmem [thread:$0]  %s106, 1024, %s108, [#allocation12], 64, 64, 4
    $region41: #{tpu_custom_call.1} parent=1 // pred_fallthru
      _
    // Predicated region
    $region42: #{tpu_custom_call.1} parent=1 // pred_check
      _
    $region43: #{tpu_custom_call.1} parent=1 // pred_check_branch
      %115 = sbr.rel (0) target = $region45
    $region44: #{tpu_custom_call.1} parent=1 // pred_region
      _
    $region45: #{tpu_custom_call.1} parent=1 // pred_fallthru
      _
    // Predicated region
    $region46: #{tpu_custom_call.1} parent=1 // pred_check
      _
    $region47: #{tpu_custom_call.1} parent=1 // pred_check_branch
      %117 = sbr.rel (0) target = $region49
    $region48: #{tpu_custom_call.1} parent=1 // pred_region
      %119 = dma.done [#allocation3], 64
    $region49: #{tpu_custom_call.1} parent=1 // pred_fallthru
      _
    // Predicated region
    $region50: #{tpu_custom_call.1} parent=1 // pred_check
      _
    $region51: #{tpu_custom_call.1} parent=1 // pred_check_branch
      %121 = sbr.rel (0) target = $region53
    $region52: #{tpu_custom_call.1} parent=1 // pred_region
      %123 = dma.done [#allocation6], 512
    $region53: #{tpu_custom_call.1} parent=1 // pred_fallthru
      _
    // Predicated region
    $region54: #{tpu_custom_call.1} parent=1 // pred_check
      _
    $region55: #{tpu_custom_call.1} parent=1 // pred_check_branch
      %125 = sbr.rel (0) target = $region57
    $region56: #{tpu_custom_call.1} parent=1 // pred_region
      %127 = dma.done [#allocation6], 32
    $region57: #{tpu_custom_call.1} parent=1 // pred_fallthru
      _
    // Predicated region
    $region58: #{tpu_custom_call.1} parent=1 // pred_check
      _
    $region59: #{tpu_custom_call.1} parent=1 // pred_check_branch
      %129 = sbr.rel (0) target = $region61
    $region60: #{tpu_custom_call.1} parent=1 // pred_region
      %131 = dma.done [#allocation9], 4096
    $region61: #{tpu_custom_call.1} parent=1 // pred_fallthru
      _
    // Predicated region
    $region62: #{tpu_custom_call.1} parent=1 // pred_check
      _
    $region63: #{tpu_custom_call.1} parent=1 // pred_check_branch
      %133 = sbr.rel (0) target = $region65
    $region64: #{tpu_custom_call.1} parent=1 // pred_region
      %135 = dma.done [#allocation9], 4096
    $region65: #{tpu_custom_call.1} parent=1 // pred_fallthru
      _
    // Predicated region
    $region66: #{tpu_custom_call.1} parent=1 // pred_check
      _
    $region67: #{tpu_custom_call.1} parent=1 // pred_check_branch
      %137 = sbr.rel (0) target = $region69
    $region68: #{tpu_custom_call.1} parent=1 // pred_region
      %139 = dma.done [#allocation12], 2048
    $region69: #{tpu_custom_call.1} parent=1 // pred_fallthru
      _
    // Predicated region
    $region70: #{tpu_custom_call.1} parent=1 // pred_check
      _
    $region71: #{tpu_custom_call.1} parent=1 // pred_check_branch
      %141 = sbr.rel (0) target = $region73
    $region72: #{tpu_custom_call.1} parent=1 // pred_region
      %143 = dma.done [#allocation12], 1024
    $region73: #{tpu_custom_call.1} parent=1 // pred_fallthru
      _
    %v145 = vld [vmem:[#allocation2] sm:$0xf]
    %v146 = vld [vmem:[#allocation5] sm:$0xff]
    %v147 = vld [vmem:[#allocation5 + $0x8] sm:$0xff]
    %v148 = vld [vmem:[#allocation5 + $0x10] sm:$0xff]
    %v149 = vld [vmem:[#allocation5 + $0x18] sm:$0xff]
    %v150 = vld [vmem:[#allocation7] sm:$0x3]
    %v152 = vperm.slane %v150, 0
    %v153 = vperm.slane %v150, 1
    %v160 = vunpack.c.l.b16 %v146
    %v161 = vunpack.c.h.b16 %v146
    %v162 = vunpack.c.l.b16 %v147
    %v163 = vunpack.c.h.b16 %v147
    %v164 = vunpack.c.l.b16 %v148
    %v165 = vunpack.c.h.b16 %v148
    %v166 = vunpack.c.l.b16 %v149
    %v167 = vunpack.c.h.b16 %v149
    %v168 = vpack.c.b16 %v162, %v160
    %v169 = vpack.c.b16 %v163, %v161
    %v170 = vpack.c.b16 %v166, %v164
    %v171 = vpack.c.b16 %v167, %v165
    %vm176 = vcmask 261120
    %v178 = vsel %vm176, %v145, 0
    %180 = vmatpush.bf16.msra.mxu0 0
    %181 = vmatpush.bf16.msra.mxu0 0
    %182 = vmatpush.bf16.msra.mxu0 0
    %183 = vmatpush.bf16.msra.mxu0 0
    %184 = vmatpush.bf16.msra.mxu0 0
    %185 = vmatpush.bf16.msra.mxu0 0
    %186 = vmatpush.bf16.msra.mxu0 %v170
    %187 = vmatpush.bf16.msra.mxu0 %v168
    %188 = vmatmul.bf16.gmra.mxu0 %v178
    %v189 = vpop.f32.mrf.mxu0
    %v190 = vadd.f32 %v152, %v189
    %v191 = vpop.f32.mrf.mxu0
    %192 = vdwg.mxu0
    %193 = vmatpush.bf16.msra.mxu0 0
    %194 = vmatpush.bf16.msra.mxu0 0
    %195 = vmatpush.bf16.msra.mxu0 0
    %196 = vmatpush.bf16.msra.mxu0 0
    %197 = vmatpush.bf16.msra.mxu0 0
    %198 = vmatpush.bf16.msra.mxu0 0
    %199 = vmatpush.bf16.msra.mxu0 %v171
    %200 = vmatpush.bf16.msra.mxu0 %v169
    %201 = vmatmul.bf16.gmra.mxu0 %v178
    %v202 = vpop.f32.mrf.mxu0
    %v203 = vadd.f32 %v153, %v202
    %v204 = vpop.f32.mrf.mxu0
    %205 = vdwg.mxu0
    %v206 = vmul.f32 %v190, 0.01
    %v207 = vmul.f32 %v203, 0.01
    %v208 = vmax.f32 %v190, %v206
    %v209 = vmax.f32 %v203, %v207
    %v210 = vpack.c.bf16 %v208, %v208
    %v211 = vpack.c.bf16 %v209, %v209
    %v212 = vld [vmem:[#allocation8] sm:$0xff]
    %v213 = vld [vmem:[#allocation8 + $0x8] sm:$0xff]
    %v214 = vld [vmem:[#allocation8 + $0x10] sm:$0xff]
    %v215 = vld [vmem:[#allocation8 + $0x18] sm:$0xff]
    %v216 = vld [vmem:[#allocation8 + $0x20] sm:$0xff]
    %v217 = vld [vmem:[#allocation8 + $0x28] sm:$0xff]
    %v218 = vld [vmem:[#allocation8 + $0x30] sm:$0xff]
    %v219 = vld [vmem:[#allocation8 + $0x38] sm:$0xff]
    %v220 = vld [vmem:[#allocation8 + $0x40] sm:$0xff]
    %v221 = vld [vmem:[#allocation8 + $0x48] sm:$0xff]
    %v222 = vld [vmem:[#allocation8 + $0x50] sm:$0xff]
    %v223 = vld [vmem:[#allocation8 + $0x58] sm:$0xff]
    %v224 = vld [vmem:[#allocation8 + $0x60] sm:$0xff]
    %v225 = vld [vmem:[#allocation8 + $0x68] sm:$0xff]
    %v226 = vld [vmem:[#allocation8 + $0x70] sm:$0xff]
    %v227 = vld [vmem:[#allocation8 + $0x78] sm:$0xff]
    %v228 = vld [vmem:[#allocation8 + $0x80] sm:$0xff]
    %v229 = vld [vmem:[#allocation8 + $0x88] sm:$0xff]
    %v230 = vld [vmem:[#allocation8 + $0x90] sm:$0xff]
    %v231 = vld [vmem:[#allocation8 + $0x98] sm:$0xff]
    %v232 = vld [vmem:[#allocation8 + $0xa0] sm:$0xff]
    %v233 = vld [vmem:[#allocation8 + $0xa8] sm:$0xff]
    %v234 = vld [vmem:[#allocation8 + $0xb0] sm:$0xff]
    %v235 = vld [vmem:[#allocation8 + $0xb8] sm:$0xff]
    %v236 = vld [vmem:[#allocation8 + $0xc0] sm:$0xff]
    %v237 = vld [vmem:[#allocation8 + $0xc8] sm:$0xff]
    %v238 = vld [vmem:[#allocation8 + $0xd0] sm:$0xff]
    %v239 = vld [vmem:[#allocation8 + $0xd8] sm:$0xff]
    %v240 = vld [vmem:[#allocation8 + $0xe0] sm:$0xff]
    %v241 = vld [vmem:[#allocation8 + $0xe8] sm:$0xff]
    %v242 = vld [vmem:[#allocation8 + $0xf0] sm:$0xff]
    %v243 = vld [vmem:[#allocation8 + $0xf8] sm:$0xff]
    %v244 = vld [vmem:[%s4] sm:$0x3]
    %v246 = vperm.slane %v244, 0
    %v247 = vperm.slane %v244, 1
    %v282 = vunpack.c.l.b16 %v212
    %v283 = vunpack.c.h.b16 %v212
    %v284 = vunpack.c.l.b16 %v213
    %v285 = vunpack.c.h.b16 %v213
    %v286 = vunpack.c.l.b16 %v214
    %v287 = vunpack.c.h.b16 %v214
    %v288 = vunpack.c.l.b16 %v215
    %v289 = vunpack.c.h.b16 %v215
    %v290 = vunpack.c.l.b16 %v216
    %v291 = vunpack.c.h.b16 %v216
    %v292 = vunpack.c.l.b16 %v217
    %v293 = vunpack.c.h.b16 %v217
    %v294 = vunpack.c.l.b16 %v218
    %v295 = vunpack.c.h.b16 %v218
    %v296 = vunpack.c.l.b16 %v219
    %v297 = vunpack.c.h.b16 %v219
    %v298 = vunpack.c.l.b16 %v220
    %v299 = vunpack.c.h.b16 %v220
    %v300 = vunpack.c.l.b16 %v221
    %v301 = vunpack.c.h.b16 %v221
    %v302 = vunpack.c.l.b16 %v222
    %v303 = vunpack.c.h.b16 %v222
    %v304 = vunpack.c.l.b16 %v223
    %v305 = vunpack.c.h.b16 %v223
    %v306 = vunpack.c.l.b16 %v224
    %v307 = vunpack.c.h.b16 %v224
    %v308 = vunpack.c.l.b16 %v225
    %v309 = vunpack.c.h.b16 %v225
    %v310 = vunpack.c.l.b16 %v226
    %v311 = vunpack.c.h.b16 %v226
    %v312 = vunpack.c.l.b16 %v227
    %v313 = vunpack.c.h.b16 %v227
    %v314 = vunpack.c.l.b16 %v228
    %v315 = vunpack.c.h.b16 %v228
    %v316 = vunpack.c.l.b16 %v229
    %v317 = vunpack.c.h.b16 %v229
    %v318 = vunpack.c.l.b16 %v230
    %v319 = vunpack.c.h.b16 %v230
    %v320 = vunpack.c.l.b16 %v231
    %v321 = vunpack.c.h.b16 %v231
    %v322 = vunpack.c.l.b16 %v232
    %v323 = vunpack.c.h.b16 %v232
    %v324 = vunpack.c.l.b16 %v233
    %v325 = vunpack.c.h.b16 %v233
    %v326 = vunpack.c.l.b16 %v234
    %v327 = vunpack.c.h.b16 %v234
    %v328 = vunpack.c.l.b16 %v235
    %v329 = vunpack.c.h.b16 %v235
    %v330 = vunpack.c.l.b16 %v236
    %v331 = vunpack.c.h.b16 %v236
    %v332 = vunpack.c.l.b16 %v237
    %v333 = vunpack.c.h.b16 %v237
    %v334 = vunpack.c.l.b16 %v238
    %v335 = vunpack.c.h.b16 %v238
    %v336 = vunpack.c.l.b16 %v239
    %v337 = vunpack.c.h.b16 %v239
    %v338 = vunpack.c.l.b16 %v240
    %v339 = vunpack.c.h.b16 %v240
    %v340 = vunpack.c.l.b16 %v241
    %v341 = vunpack.c.h.b16 %v241
    %v342 = vunpack.c.l.b16 %v242
    %v343 = vunpack.c.h.b16 %v242
    %v344 = vunpack.c.l.b16 %v243
    %v345 = vunpack.c.h.b16 %v243
    %v346 = vpack.c.b16 %v284, %v282
    %v347 = vpack.c.b16 %v285, %v283
    %v348 = vpack.c.b16 %v288, %v286
    %v349 = vpack.c.b16 %v289, %v287
    %v350 = vpack.c.b16 %v292, %v290
    %v351 = vpack.c.b16 %v293, %v291
    %v352 = vpack.c.b16 %v296, %v294
    %v353 = vpack.c.b16 %v297, %v295
    %v354 = vpack.c.b16 %v300, %v298
    %v355 = vpack.c.b16 %v301, %v299
    %v356 = vpack.c.b16 %v304, %v302
    %v357 = vpack.c.b16 %v305, %v303
    %v358 = vpack.c.b16 %v308, %v306
    %v359 = vpack.c.b16 %v309, %v307
    %v360 = vpack.c.b16 %v312, %v310
    %v361 = vpack.c.b16 %v313, %v311
    %v362 = vpack.c.b16 %v316, %v314
    %v363 = vpack.c.b16 %v317, %v315
    %v364 = vpack.c.b16 %v320, %v318
    %v365 = vpack.c.b16 %v321, %v319
    %v366 = vpack.c.b16 %v324, %v322
    %v367 = vpack.c.b16 %v325, %v323
    %v368 = vpack.c.b16 %v328, %v326
    %v369 = vpack.c.b16 %v329, %v327
    %v370 = vpack.c.b16 %v332, %v330
    %v371 = vpack.c.b16 %v333, %v331
    %v372 = vpack.c.b16 %v336, %v334
    %v373 = vpack.c.b16 %v337, %v335
    %v374 = vpack.c.b16 %v340, %v338
    %v375 = vpack.c.b16 %v341, %v339
    %v376 = vpack.c.b16 %v344, %v342
    %v377 = vpack.c.b16 %v345, %v343
    %410 = vmatpush.bf16.msra.mxu0 %v360
    %411 = vmatpush.bf16.msra.mxu0 %v358
    %412 = vmatpush.bf16.msra.mxu0 %v356
    %413 = vmatpush.bf16.msra.mxu0 %v354
    %414 = vmatpush.bf16.msra.mxu0 %v352
    %415 = vmatpush.bf16.msra.mxu0 %v350
    %416 = vmatpush.bf16.msra.mxu0 %v348
    %417 = vmatpush.bf16.msra.mxu0 %v346
    %418 = vmatmul.bf16.gmra.mxu0 %v210
    %v419 = vpop.f32.mrf.mxu0
    %v420 = vadd.f32 %v246, %v419
    %v421 = vpop.f32.mrf.mxu0
    %422 = vdwg.mxu0
    %423 = vmatpush.bf16.msra.mxu0 %v376
    %424 = vmatpush.bf16.msra.mxu0 %v374
    %425 = vmatpush.bf16.msra.mxu0 %v372
    %426 = vmatpush.bf16.msra.mxu0 %v370
    %427 = vmatpush.bf16.msra.mxu0 %v368
    %428 = vmatpush.bf16.msra.mxu0 %v366
    %429 = vmatpush.bf16.msra.mxu0 %v364
    %430 = vmatpush.bf16.msra.mxu0 %v362
    %431 = vmatmul.bf16.gmra.mxu0 %v211
    %v432 = vpop.f32.mrf.mxu0
    %v433 = vadd.f32 %v420, %v432
    %v434 = vpop.f32.mrf.mxu0
    %435 = vdwg.mxu0
    %436 = vmatpush.bf16.msra.mxu0 %v361
    %437 = vmatpush.bf16.msra.mxu0 %v359
    %438 = vmatpush.bf16.msra.mxu0 %v357
    %439 = vmatpush.bf16.msra.mxu0 %v355
    %440 = vmatpush.bf16.msra.mxu0 %v353
    %441 = vmatpush.bf16.msra.mxu0 %v351
    %442 = vmatpush.bf16.msra.mxu0 %v349
    %443 = vmatpush.bf16.msra.mxu0 %v347
    %444 = vmatmul.bf16.gmra.mxu0 %v210
    %v445 = vpop.f32.mrf.mxu0
    %v446 = vadd.f32 %v247, %v445
    %v447 = vpop.f32.mrf.mxu0
    %448 = vdwg.mxu0
    %449 = vmatpush.bf16.msra.mxu0 %v377
    %450 = vmatpush.bf16.msra.mxu0 %v375
    %451 = vmatpush.bf16.msra.mxu0 %v373
    %452 = vmatpush.bf16.msra.mxu0 %v371
    %453 = vmatpush.bf16.msra.mxu0 %v369
    %454 = vmatpush.bf16.msra.mxu0 %v367
    %455 = vmatpush.bf16.msra.mxu0 %v365
    %456 = vmatpush.bf16.msra.mxu0 %v363
    %457 = vmatmul.bf16.gmra.mxu0 %v211
    %v458 = vpop.f32.mrf.mxu0
    %v459 = vadd.f32 %v446, %v458
    %v460 = vpop.f32.mrf.mxu0
    %461 = vdwg.mxu0
    %v462 = vmul.f32 %v433, 0.01
    %v463 = vmul.f32 %v459, 0.01
    %v464 = vmax.f32 %v433, %v462
    %v465 = vmax.f32 %v459, %v463
    %v466 = vpack.c.bf16 %v464, %v464
    %v467 = vpack.c.bf16 %v465, %v465
    %v468 = vld [vmem:[#allocation10] sm:$0xff]
    %v469 = vld [vmem:[#allocation10 + $0x8] sm:$0xff]
    %v470 = vld [vmem:[#allocation10 + $0x10] sm:$0xff]
    %v471 = vld [vmem:[#allocation10 + $0x18] sm:$0xff]
    %v472 = vld [vmem:[#allocation10 + $0x20] sm:$0xff]
    %v473 = vld [vmem:[#allocation10 + $0x28] sm:$0xff]
    %v474 = vld [vmem:[#allocation10 + $0x30] sm:$0xff]
    %v475 = vld [vmem:[#allocation10 + $0x38] sm:$0xff]
    %v476 = vld [vmem:[#allocation10 + $0x40] sm:$0xff]
    %v477 = vld [vmem:[#allocation10 + $0x48] sm:$0xff]
    %v478 = vld [vmem:[#allocation10 + $0x50] sm:$0xff]
    %v479 = vld [vmem:[#allocation10 + $0x58] sm:$0xff]
    %v480 = vld [vmem:[#allocation10 + $0x60] sm:$0xff]
    %v481 = vld [vmem:[#allocation10 + $0x68] sm:$0xff]
    %v482 = vld [vmem:[#allocation10 + $0x70] sm:$0xff]
    %v483 = vld [vmem:[#allocation10 + $0x78] sm:$0xff]
    %v484 = vld [vmem:[#allocation10 + $0x80] sm:$0xff]
    %v485 = vld [vmem:[#allocation10 + $0x88] sm:$0xff]
    %v486 = vld [vmem:[#allocation10 + $0x90] sm:$0xff]
    %v487 = vld [vmem:[#allocation10 + $0x98] sm:$0xff]
    %v488 = vld [vmem:[#allocation10 + $0xa0] sm:$0xff]
    %v489 = vld [vmem:[#allocation10 + $0xa8] sm:$0xff]
    %v490 = vld [vmem:[#allocation10 + $0xb0] sm:$0xff]
    %v491 = vld [vmem:[#allocation10 + $0xb8] sm:$0xff]
    %v492 = vld [vmem:[#allocation10 + $0xc0] sm:$0xff]
    %v493 = vld [vmem:[#allocation10 + $0xc8] sm:$0xff]
    %v494 = vld [vmem:[#allocation10 + $0xd0] sm:$0xff]
    %v495 = vld [vmem:[#allocation10 + $0xd8] sm:$0xff]
    %v496 = vld [vmem:[#allocation10 + $0xe0] sm:$0xff]
    %v497 = vld [vmem:[#allocation10 + $0xe8] sm:$0xff]
    %v498 = vld [vmem:[#allocation10 + $0xf0] sm:$0xff]
    %v499 = vld [vmem:[#allocation10 + $0xf8] sm:$0xff]
    %v500 = vld [vmem:[%s6] sm:$0x3]
    %v502 = vperm.slane %v500, 0
    %v503 = vperm.slane %v500, 1
    %v538 = vunpack.c.l.b16 %v468
    %v539 = vunpack.c.h.b16 %v468
    %v540 = vunpack.c.l.b16 %v469
    %v541 = vunpack.c.h.b16 %v469
    %v542 = vunpack.c.l.b16 %v470
    %v543 = vunpack.c.h.b16 %v470
    %v544 = vunpack.c.l.b16 %v471
    %v545 = vunpack.c.h.b16 %v471
    %v546 = vunpack.c.l.b16 %v472
    %v547 = vunpack.c.h.b16 %v472
    %v548 = vunpack.c.l.b16 %v473
    %v549 = vunpack.c.h.b16 %v473
    %v550 = vunpack.c.l.b16 %v474
    %v551 = vunpack.c.h.b16 %v474
    %v552 = vunpack.c.l.b16 %v475
    %v553 = vunpack.c.h.b16 %v475
    %v554 = vunpack.c.l.b16 %v476
    %v555 = vunpack.c.h.b16 %v476
    %v556 = vunpack.c.l.b16 %v477
    %v557 = vunpack.c.h.b16 %v477
    %v558 = vunpack.c.l.b16 %v478
    %v559 = vunpack.c.h.b16 %v478
    %v560 = vunpack.c.l.b16 %v479
    %v561 = vunpack.c.h.b16 %v479
    %v562 = vunpack.c.l.b16 %v480
    %v563 = vunpack.c.h.b16 %v480
    %v564 = vunpack.c.l.b16 %v481
    %v565 = vunpack.c.h.b16 %v481
    %v566 = vunpack.c.l.b16 %v482
    %v567 = vunpack.c.h.b16 %v482
    %v568 = vunpack.c.l.b16 %v483
    %v569 = vunpack.c.h.b16 %v483
    %v570 = vunpack.c.l.b16 %v484
    %v571 = vunpack.c.h.b16 %v484
    %v572 = vunpack.c.l.b16 %v485
    %v573 = vunpack.c.h.b16 %v485
    %v574 = vunpack.c.l.b16 %v486
    %v575 = vunpack.c.h.b16 %v486
    %v576 = vunpack.c.l.b16 %v487
    %v577 = vunpack.c.h.b16 %v487
    %v578 = vunpack.c.l.b16 %v488
    %v579 = vunpack.c.h.b16 %v488
    %v580 = vunpack.c.l.b16 %v489
    %v581 = vunpack.c.h.b16 %v489
    %v582 = vunpack.c.l.b16 %v490
    %v583 = vunpack.c.h.b16 %v490
    %v584 = vunpack.c.l.b16 %v491
    %v585 = vunpack.c.h.b16 %v491
    %v586 = vunpack.c.l.b16 %v492
    %v587 = vunpack.c.h.b16 %v492
    %v588 = vunpack.c.l.b16 %v493
    %v589 = vunpack.c.h.b16 %v493
    %v590 = vunpack.c.l.b16 %v494
    %v591 = vunpack.c.h.b16 %v494
    %v592 = vunpack.c.l.b16 %v495
    %v593 = vunpack.c.h.b16 %v495
    %v594 = vunpack.c.l.b16 %v496
    %v595 = vunpack.c.h.b16 %v496
    %v596 = vunpack.c.l.b16 %v497
    %v597 = vunpack.c.h.b16 %v497
    %v598 = vunpack.c.l.b16 %v498
    %v599 = vunpack.c.h.b16 %v498
    %v600 = vunpack.c.l.b16 %v499
    %v601 = vunpack.c.h.b16 %v499
    %v602 = vpack.c.b16 %v540, %v538
    %v603 = vpack.c.b16 %v541, %v539
    %v604 = vpack.c.b16 %v544, %v542
    %v605 = vpack.c.b16 %v545, %v543
    %v606 = vpack.c.b16 %v548, %v546
    %v607 = vpack.c.b16 %v549, %v547
    %v608 = vpack.c.b16 %v552, %v550
    %v609 = vpack.c.b16 %v553, %v551
    %v610 = vpack.c.b16 %v556, %v554
    %v611 = vpack.c.b16 %v557, %v555
    %v612 = vpack.c.b16 %v560, %v558
    %v613 = vpack.c.b16 %v561, %v559
    %v614 = vpack.c.b16 %v564, %v562
    %v615 = vpack.c.b16 %v565, %v563
    %v616 = vpack.c.b16 %v568, %v566
    %v617 = vpack.c.b16 %v569, %v567
    %v618 = vpack.c.b16 %v572, %v570
    %v619 = vpack.c.b16 %v573, %v571
    %v620 = vpack.c.b16 %v576, %v574
    %v621 = vpack.c.b16 %v577, %v575
    %v622 = vpack.c.b16 %v580, %v578
    %v623 = vpack.c.b16 %v581, %v579
    %v624 = vpack.c.b16 %v584, %v582
    %v625 = vpack.c.b16 %v585, %v583
    %v626 = vpack.c.b16 %v588, %v586
    %v627 = vpack.c.b16 %v589, %v587
    %v628 = vpack.c.b16 %v592, %v590
    %v629 = vpack.c.b16 %v593, %v591
    %v630 = vpack.c.b16 %v596, %v594
    %v631 = vpack.c.b16 %v597, %v595
    %v632 = vpack.c.b16 %v600, %v598
    %v633 = vpack.c.b16 %v601, %v599
    %666 = vmatpush.bf16.msra.mxu0 %v616
    %667 = vmatpush.bf16.msra.mxu0 %v614
    %668 = vmatpush.bf16.msra.mxu0 %v612
    %669 = vmatpush.bf16.msra.mxu0 %v610
    %670 = vmatpush.bf16.msra.mxu0 %v608
    %671 = vmatpush.bf16.msra.mxu0 %v606
    %672 = vmatpush.bf16.msra.mxu0 %v604
    %673 = vmatpush.bf16.msra.mxu0 %v602
    %674 = vmatmul.bf16.gmra.mxu0 %v466
    %v675 = vpop.f32.mrf.mxu0
    %v676 = vadd.f32 %v502, %v675
    %v677 = vpop.f32.mrf.mxu0
    %678 = vdwg.mxu0
    %679 = vmatpush.bf16.msra.mxu0 %v632
    %680 = vmatpush.bf16.msra.mxu0 %v630
    %681 = vmatpush.bf16.msra.mxu0 %v628
    %682 = vmatpush.bf16.msra.mxu0 %v626
    %683 = vmatpush.bf16.msra.mxu0 %v624
    %684 = vmatpush.bf16.msra.mxu0 %v622
    %685 = vmatpush.bf16.msra.mxu0 %v620
    %686 = vmatpush.bf16.msra.mxu0 %v618
    %687 = vmatmul.bf16.gmra.mxu0 %v467
    %v688 = vpop.f32.mrf.mxu0
    %v689 = vadd.f32 %v676, %v688
    %v690 = vpop.f32.mrf.mxu0
    %691 = vdwg.mxu0
    %692 = vmatpush.bf16.msra.mxu0 %v617
    %693 = vmatpush.bf16.msra.mxu0 %v615
    %694 = vmatpush.bf16.msra.mxu0 %v613
    %695 = vmatpush.bf16.msra.mxu0 %v611
    %696 = vmatpush.bf16.msra.mxu0 %v609
    %697 = vmatpush.bf16.msra.mxu0 %v607
    %698 = vmatpush.bf16.msra.mxu0 %v605
    %699 = vmatpush.bf16.msra.mxu0 %v603
    %700 = vmatmul.bf16.gmra.mxu0 %v466
    %v701 = vpop.f32.mrf.mxu0
    %v702 = vadd.f32 %v503, %v701
    %v703 = vpop.f32.mrf.mxu0
    %704 = vdwg.mxu0
    %705 = vmatpush.bf16.msra.mxu0 %v633
    %706 = vmatpush.bf16.msra.mxu0 %v631
    %707 = vmatpush.bf16.msra.mxu0 %v629
    %708 = vmatpush.bf16.msra.mxu0 %v627
    %709 = vmatpush.bf16.msra.mxu0 %v625
    %710 = vmatpush.bf16.msra.mxu0 %v623
    %711 = vmatpush.bf16.msra.mxu0 %v621
    %712 = vmatpush.bf16.msra.mxu0 %v619
    %713 = vmatmul.bf16.gmra.mxu0 %v467
    %v714 = vpop.f32.mrf.mxu0
    %v715 = vadd.f32 %v702, %v714
    %v716 = vpop.f32.mrf.mxu0
    %717 = vdwg.mxu0
    %v718 = vmul.f32 %v689, 0.01
    %v719 = vmul.f32 %v715, 0.01
    %v720 = vmax.f32 %v689, %v718
    %v721 = vmax.f32 %v715, %v719
    %v722 = vpack.c.bf16 %v720, %v720
    %v723 = vpack.c.bf16 %v721, %v721
    %v724 = vld [vmem:[#allocation11] sm:$0xf]
    %v725 = vld [vmem:[#allocation11 + $0x4] sm:$0xf]
    %v726 = vld [vmem:[#allocation11 + $0x8] sm:$0xf]
    %v727 = vld [vmem:[#allocation11 + $0xc] sm:$0xf]
    %v728 = vld [vmem:[#allocation11 + $0x10] sm:$0xf]
    %v729 = vld [vmem:[#allocation11 + $0x14] sm:$0xf]
    %v730 = vld [vmem:[#allocation11 + $0x18] sm:$0xf]
    %v731 = vld [vmem:[#allocation11 + $0x1c] sm:$0xf]
    %v732 = vld [vmem:[#allocation11 + $0x20] sm:$0xf]
    %v733 = vld [vmem:[#allocation11 + $0x24] sm:$0xf]
    %v734 = vld [vmem:[#allocation11 + $0x28] sm:$0xf]
    %v735 = vld [vmem:[#allocation11 + $0x2c] sm:$0xf]
    %v736 = vld [vmem:[#allocation11 + $0x30] sm:$0xf]
    %v737 = vld [vmem:[#allocation11 + $0x34] sm:$0xf]
    %v738 = vld [vmem:[#allocation11 + $0x38] sm:$0xf]
    %v739 = vld [vmem:[#allocation11 + $0x3c] sm:$0xf]
    %v740 = vld [vmem:[#allocation11 + $0x40] sm:$0xf]
    %v741 = vld [vmem:[#allocation11 + $0x44] sm:$0xf]
    %v742 = vld [vmem:[#allocation11 + $0x48] sm:$0xf]
    %v743 = vld [vmem:[#allocation11 + $0x4c] sm:$0xf]
    %v744 = vld [vmem:[#allocation11 + $0x50] sm:$0xf]
    %v745 = vld [vmem:[#allocation11 + $0x54] sm:$0xf]
    %v746 = vld [vmem:[#allocation11 + $0x58] sm:$0xf]
    %v747 = vld [vmem:[#allocation11 + $0x5c] sm:$0xf]
    %v748 = vld [vmem:[#allocation11 + $0x60] sm:$0xf]
    %v749 = vld [vmem:[#allocation11 + $0x64] sm:$0xf]
    %v750 = vld [vmem:[#allocation11 + $0x68] sm:$0xf]
    %v751 = vld [vmem:[#allocation11 + $0x6c] sm:$0xf]
    %v752 = vld [vmem:[#allocation11 + $0x70] sm:$0xf]
    %v753 = vld [vmem:[#allocation11 + $0x74] sm:$0xf]
    %v754 = vld [vmem:[#allocation11 + $0x78] sm:$0xf]
    %v755 = vld [vmem:[#allocation11 + $0x7c] sm:$0xf]
    %v756 = vld [vmem:[%s8] sm:$0x1]
    %v758 = vperm.slane %v756, 0
    %v792 = vunpack.c.l.b16 %v724
    %v793 = vunpack.c.l.b16 %v725
    %v794 = vunpack.c.l.b16 %v726
    %v795 = vunpack.c.l.b16 %v727
    %v796 = vunpack.c.l.b16 %v728
    %v797 = vunpack.c.l.b16 %v729
    %v798 = vunpack.c.l.b16 %v730
    %v799 = vunpack.c.l.b16 %v731
    %v800 = vunpack.c.l.b16 %v732
    %v801 = vunpack.c.l.b16 %v733
    %v802 = vunpack.c.l.b16 %v734
    %v803 = vunpack.c.l.b16 %v735
    %v804 = vunpack.c.l.b16 %v736
    %v805 = vunpack.c.l.b16 %v737
    %v806 = vunpack.c.l.b16 %v738
    %v807 = vunpack.c.l.b16 %v739
    %v808 = vunpack.c.l.b16 %v740
    %v809 = vunpack.c.l.b16 %v741
    %v810 = vunpack.c.l.b16 %v742
    %v811 = vunpack.c.l.b16 %v743
    %v812 = vunpack.c.l.b16 %v744
    %v813 = vunpack.c.l.b16 %v745
    %v814 = vunpack.c.l.b16 %v746
    %v815 = vunpack.c.l.b16 %v747
    %v816 = vunpack.c.l.b16 %v748
    %v817 = vunpack.c.l.b16 %v749
    %v818 = vunpack.c.l.b16 %v750
    %v819 = vunpack.c.l.b16 %v751
    %v820 = vunpack.c.l.b16 %v752
    %v821 = vunpack.c.l.b16 %v753
    %v822 = vunpack.c.l.b16 %v754
    %v823 = vunpack.c.l.b16 %v755
    %v824 = vpack.c.b16 %v793, %v792
    %v825 = vpack.c.b16 %v795, %v794
    %v826 = vpack.c.b16 %v797, %v796
    %v827 = vpack.c.b16 %v799, %v798
    %v828 = vpack.c.b16 %v801, %v800
    %v829 = vpack.c.b16 %v803, %v802
    %v830 = vpack.c.b16 %v805, %v804
    %v831 = vpack.c.b16 %v807, %v806
    %v832 = vpack.c.b16 %v809, %v808
    %v833 = vpack.c.b16 %v811, %v810
    %v834 = vpack.c.b16 %v813, %v812
    %v835 = vpack.c.b16 %v815, %v814
    %v836 = vpack.c.b16 %v817, %v816
    %v837 = vpack.c.b16 %v819, %v818
    %v838 = vpack.c.b16 %v821, %v820
    %v839 = vpack.c.b16 %v823, %v822
    %856 = vmatpush.bf16.msra.mxu0 %v831
    %857 = vmatpush.bf16.msra.mxu0 %v830
    %858 = vmatpush.bf16.msra.mxu0 %v829
    %859 = vmatpush.bf16.msra.mxu0 %v828
    %860 = vmatpush.bf16.msra.mxu0 %v827
    %861 = vmatpush.bf16.msra.mxu0 %v826
    %862 = vmatpush.bf16.msra.mxu0 %v825
    %863 = vmatpush.bf16.msra.mxu0 %v824
    %864 = vmatmul.bf16.gmra.mxu0 %v722
    %v865 = vpop.f32.mrf.mxu0
    %v866 = vadd.f32 %v758, %v865
    %v867 = vpop.f32.mrf.mxu0
    %868 = vdwg.mxu0
    %869 = vmatpush.bf16.msra.mxu0 %v839
    %870 = vmatpush.bf16.msra.mxu0 %v838
    %871 = vmatpush.bf16.msra.mxu0 %v837
    %872 = vmatpush.bf16.msra.mxu0 %v836
    %873 = vmatpush.bf16.msra.mxu0 %v835
    %874 = vmatpush.bf16.msra.mxu0 %v834
    %875 = vmatpush.bf16.msra.mxu0 %v833
    %876 = vmatpush.bf16.msra.mxu0 %v832
    %877 = vmatmul.bf16.gmra.mxu0 %v723
    %v878 = vpop.f32.mrf.mxu0
    %v879 = vadd.f32 %v866, %v878
    %v880 = vpop.f32.mrf.mxu0
    %881 = vdwg.mxu0
    %v882 = vmul.f32 %v879, 0.01
    %v883 = vmax.f32 %v879, %v882
    %v884 = vpack.c.bf16 %v883, %v883
    %v885 = vld [vmem:[#allocation13] sm:$0xf]
    %v886 = vld [vmem:[#allocation13 + $0x4] sm:$0xf]
    %v887 = vld [vmem:[#allocation13 + $0x8] sm:$0xf]
    %v888 = vld [vmem:[#allocation13 + $0xc] sm:$0xf]
    %v889 = vld [vmem:[#allocation13 + $0x10] sm:$0xf]
    %v890 = vld [vmem:[#allocation13 + $0x14] sm:$0xf]
    %v891 = vld [vmem:[#allocation13 + $0x18] sm:$0xf]
    %v892 = vld [vmem:[#allocation13 + $0x1c] sm:$0xf]
    %v893 = vld [vmem:[#allocation13 + $0x20] sm:$0xf]
    %v894 = vld [vmem:[#allocation13 + $0x24] sm:$0xf]
    %v895 = vld [vmem:[#allocation13 + $0x28] sm:$0xf]
    %v896 = vld [vmem:[#allocation13 + $0x2c] sm:$0xf]
    %v897 = vld [vmem:[#allocation13 + $0x30] sm:$0xf]
    %v898 = vld [vmem:[#allocation13 + $0x34] sm:$0xf]
    %v899 = vld [vmem:[#allocation13 + $0x38] sm:$0xf]
    %v900 = vld [vmem:[#allocation13 + $0x3c] sm:$0xf]
    %v901 = vld [vmem:[%s10] sm:$0x1]
    %v903 = vperm.slane %v901, 0
    %v921 = vunpack.c.l.b16 %v885
    %v922 = vunpack.c.l.b16 %v886
    %v923 = vunpack.c.l.b16 %v887
    %v924 = vunpack.c.l.b16 %v888
    %v925 = vunpack.c.l.b16 %v889
    %v926 = vunpack.c.l.b16 %v890
    %v927 = vunpack.c.l.b16 %v891
    %v928 = vunpack.c.l.b16 %v892
    %v929 = vunpack.c.l.b16 %v893
    %v930 = vunpack.c.l.b16 %v894
    %v931 = vunpack.c.l.b16 %v895
    %v932 = vunpack.c.l.b16 %v896
    %v933 = vunpack.c.l.b16 %v897
    %v934 = vunpack.c.l.b16 %v898
    %v935 = vunpack.c.l.b16 %v899
    %v936 = vunpack.c.l.b16 %v900
    %v937 = vpack.c.b16 %v922, %v921
    %v938 = vpack.c.b16 %v924, %v923
    %v939 = vpack.c.b16 %v926, %v925
    %v940 = vpack.c.b16 %v928, %v927
    %v941 = vpack.c.b16 %v930, %v929
    %v942 = vpack.c.b16 %v932, %v931
    %v943 = vpack.c.b16 %v934, %v933
    %v944 = vpack.c.b16 %v936, %v935
    %953 = vmatpush.bf16.msra.mxu0 %v944
    %954 = vmatpush.bf16.msra.mxu0 %v943
    %955 = vmatpush.bf16.msra.mxu0 %v942
    %956 = vmatpush.bf16.msra.mxu0 %v941
    %957 = vmatpush.bf16.msra.mxu0 %v940
    %958 = vmatpush.bf16.msra.mxu0 %v939
    %959 = vmatpush.bf16.msra.mxu0 %v938
    %960 = vmatpush.bf16.msra.mxu0 %v937
    %961 = vmatmul.bf16.gmra.mxu0 %v884
    %v962 = vpop.f32.mrf.mxu0
    %v963 = vadd.f32 %v903, %v962
    %v964 = vpop.f32.mrf.mxu0
    %965 = vdwg.mxu0
    %v966 = vtanh.pop %v963
    %967 = vst [vmem:[#allocation14] sm:$0xff] %v966
    // Predicated region
    $region74: #{tpu_custom_call.1} parent=1 // pred_check
      _
    $region75: #{tpu_custom_call.1} parent=1 // pred_check_branch
      %969 = sbr.rel (0) target = $region77
    $region76: #{tpu_custom_call.1} parent=1 // pred_region
      %971 = vsyncadd [#allocation4], 0
      %s973 = sshll.u32 [#allocation14], 4
      %s974 = int_to_ptr.vmem [resolvable:$true] %s973
      %s975 = sshll.u32 %s11, 4
      %s976 = int_to_ptr.hbm [resolvable:$true] %s975
      %978 = dma.vmem_to_hbm [thread:$0]  %s974, 128, %s976, [#allocation4]
    $region77: #{tpu_custom_call.1} parent=1 // pred_fallthru
      _
    // Predicated region
    $region78: #{tpu_custom_call.1} parent=1 // pred_check
      _
    $region79: #{tpu_custom_call.1} parent=1 // pred_check_branch
      %980 = sbr.rel (0) target = $region81
    $region80: #{tpu_custom_call.1} parent=1 // pred_region
      %982 = dma.done [#allocation4], 128
    $region81: #{tpu_custom_call.1} parent=1 // pred_fallthru
      _
    %983 = vsyncpa [#allocation3], 1
    %984 = vsyncpa [#allocation6], 1
    %985 = vsyncpa [#allocation9], 1
    %986 = vsyncpa [#allocation12], 1
    %987 = vsyncpa [#allocation4], 1

</llo_original>
